<compile_context>
chip_gen: v7x
topology: tpu7x:2x2x1
jax: 0.10.0
libtpu: 0.0.40
codegen_flags: <defaults>
</compile_context>

<pallas_src>
import functools

import jax
import jax.numpy as jnp
from jax.experimental import pallas as pl
from jax.experimental.pallas import tpu as pltpu

LANES = 128


def actor_kernel(s_ref, w1b_ref, w2b_ref, out_ref, *, num_actions):
    B, S = s_ref.shape              # (batch block, state_dim)
    H = w1b_ref.shape[1]            # hidden_dim
    A_pad = out_ref.shape[1]        # action lanes padded to a multiple of 128

    s = s_ref[...]

    # ---- layer 1: h = relu(s @ W1 + b1)   (unrolled VPU MAC, K = state_dim)
    # bias is stored as the last row of w1b.
    h = w1b_ref[S:S + 1, :] + s[:, 0:1] * w1b_ref[0:1, :]
    for k in range(1, S):
        h = h + s[:, k:k + 1] * w1b_ref[k:k + 1, :]
    h = jnp.maximum(h, 0.0)

    # ---- layer 2: logits = h @ W2 + b2    (unrolled VPU MAC, K = hidden_dim)
    logits = w2b_ref[H:H + 1, :] + h[:, 0:1] * w2b_ref[0:1, :]
    for k in range(1, H):
        logits = logits + h[:, k:k + 1] * w2b_ref[k:k + 1, :]

    # ---- numerically stable softmax over the first `num_actions` lanes.
    # Static lane slices + VPU max/add instead of an XLU axis=-1 reduce.
    cols = [logits[:, a:a + 1] for a in range(num_actions)]
    m = cols[0]
    for c in cols[1:]:
        m = jnp.maximum(m, c)
    exps = [jnp.exp(c - m) for c in cols]
    denom = exps[0]
    for e in exps[1:]:
        denom = denom + e
    inv = pl.reciprocal(denom, approx=True)   # EUP vrcp; slot otherwise idle

    # Scatter per-action probabilities into a lane-dense (B, A_pad) slab so the
    # writeback store is a full-lane vst (no masked partial stores).
    lane = jax.lax.broadcasted_iota(jnp.int32, (B, A_pad), dimension=1)
    probs = jnp.zeros((B, A_pad), jnp.float32)
    for a in range(num_actions):
        probs = jnp.where(lane == a, exps[a] * inv, probs)
    out_ref[...] = probs.astype(out_ref.dtype)


def actor_forward(s, w1, b1, w2, b2, *, block_batch=256):
    """probs = softmax(relu(s @ w1 + b1) @ w2 + b2, axis=-1)."""
    B, S = s.shape
    H = w1.shape[1]
    A = w2.shape[1]
    A_pad = pl.cdiv(A, LANES) * LANES

    # Fold biases in as an extra weight row; pad the action axis to full lanes.
    w1b = jnp.concatenate([w1, b1.reshape(1, -1)], axis=0)          # (S+1, H)
    w2b = jnp.zeros((H + 1, A_pad), w2.dtype)
    w2b = w2b.at[:H, :A].set(w2).at[H, :A].set(b2.reshape(-1))      # (H+1, A_pad)

    # Batch tiling: blocks are multiples of 8 rows; pad B so the grid divides.
    tb = min(block_batch, pl.cdiv(B, 8) * 8)
    B_pad = pl.cdiv(B, tb) * tb
    if B_pad != B:
        s = jnp.pad(s, ((0, B_pad - B), (0, 0)))
    grid_b = B_pad // tb

    kernel = functools.partial(actor_kernel, num_actions=A)
    out = pl.pallas_call(
        kernel,
        out_shape=jax.ShapeDtypeStruct((B_pad, A_pad), jnp.float32),
        grid=(grid_b,),
        in_specs=[
            pl.BlockSpec((tb, S), lambda i: (i, 0)),           # states, tiled by batch
            pl.BlockSpec((S + 1, H), lambda i: (0, 0)),        # layer-1 weights+bias
            pl.BlockSpec((H + 1, A_pad), lambda i: (0, 0)),    # layer-2 weights+bias
        ],
        out_specs=pl.BlockSpec((tb, A_pad), lambda i: (i, 0)),
        compiler_params=pltpu.CompilerParams(
            dimension_semantics=("parallel",)),
    )(s, w1b, w2b)
    return out[:B, :A]


def init_linear(key, fan_in, fan_out):
    # Deterministic init mimicking torch.nn.Linear default (uniform ±1/sqrt(fan_in)).
    k_w, k_b = jax.random.split(key)
    bound = 1.0 / jnp.sqrt(fan_in)
    w = jax.random.uniform(k_w, (fan_in, fan_out), jnp.float32, -bound, bound)
    b = jax.random.uniform(k_b, (1, fan_out), jnp.float32, -bound, bound)
    return w, b


if __name__ == "__main__":
    # Small shapes consistent with a gym classic-control task (e.g. CartPole):
    # state_dim=4, action_dim=2, hidden_dim=16, batch=8.
    state_dim, action_dim, hidden_dim, batch = 4, 2, 16, 8

    key = jax.random.PRNGKey(0)
    k_s, k_l1, k_l2 = jax.random.split(key, 3)

    s = jax.random.normal(k_s, (batch, state_dim), jnp.float32)
    w1, b1 = init_linear(k_l1, state_dim, hidden_dim)
    w2, b2 = init_linear(k_l2, hidden_dim, action_dim)

    probs = jax.block_until_ready(actor_forward(s, w1, b1, w2, b2))

    # Cross-check against a pure-JAX reference of the same forward pass.
    # (Tolerance loosened to cover the EUP approx-reciprocal, ~1e-3 rel error.)
    h_ref = jnp.maximum(s @ w1 + b1, 0.0)
    ref = jax.nn.softmax(h_ref @ w2 + b2, axis=-1)
    assert probs.shape == (batch, action_dim)
    assert jnp.allclose(probs, ref, atol=2e-3), "mismatch vs JAX reference"
    assert jnp.allclose(jnp.sum(probs, axis=-1), 1.0, atol=2e-3)

    print("KERNEL_OK")
</pallas_src>

<mosaic_0001>
module attributes {stable_mosaic.version = 11 : i64} {
  func.func @actor_kernel(%arg0: i32, %arg1: memref<8x4xf32, #tpu.memory_space<vmem>>, %arg2: memref<5x16xf32, #tpu.memory_space<vmem>>, %arg3: memref<17x128xf32, #tpu.memory_space<vmem>>, %arg4: memref<8x128xf32, #tpu.memory_space<vmem>>) attributes {dimension_semantics = [#tpu.dimension_semantics<parallel>], iteration_bounds = array<i64: 1>, scalar_prefetch = 0 : i64, scratch_operands = 0 : i64, tpu.core_type = #tpu.core_type<tc>, window_params = [{transform_indices = @transform_0, window_bounds = array<i64: 8, 4>}, {pipeline_mode = #tpu.pipeline_mode<synchronous>, transform_indices = @transform_1, window_bounds = array<i64: 5, 16>}, {pipeline_mode = #tpu.pipeline_mode<synchronous>, transform_indices = @transform_2, window_bounds = array<i64: 17, 128>}, {transform_indices = @transform_3, window_bounds = array<i64: 8, 128>}]} {
    %c0 = arith.constant 0 : index
    %c0_0 = arith.constant 0 : index
    %0 = vector.load %arg1[%c0, %c0_0] : memref<8x4xf32, #tpu.memory_space<vmem>>, vector<8x4xf32>
    %c4 = arith.constant 4 : index
    %c0_1 = arith.constant 0 : index
    %1 = vector.load %arg2[%c4, %c0_1] : memref<5x16xf32, #tpu.memory_space<vmem>>, vector<1x16xf32>
    %2 = vector.extract_strided_slice %0 {offsets = [0, 0], sizes = [8, 1], strides = [1, 1]} : vector<8x4xf32> to vector<8x1xf32>
    %c0_2 = arith.constant 0 : index
    %c0_3 = arith.constant 0 : index
    %3 = vector.load %arg2[%c0_2, %c0_3] : memref<5x16xf32, #tpu.memory_space<vmem>>, vector<1x16xf32>
    %4 = vector.broadcast %2 : vector<8x1xf32> to vector<8x16xf32>
    %5 = vector.broadcast %3 : vector<1x16xf32> to vector<8x16xf32>
    %6 = arith.mulf %4, %5 : vector<8x16xf32>
    %7 = vector.broadcast %1 : vector<1x16xf32> to vector<8x16xf32>
    %8 = arith.addf %7, %6 : vector<8x16xf32>
    %9 = vector.extract_strided_slice %0 {offsets = [0, 1], sizes = [8, 1], strides = [1, 1]} : vector<8x4xf32> to vector<8x1xf32>
    %c1 = arith.constant 1 : index
    %c0_4 = arith.constant 0 : index
    %10 = vector.load %arg2[%c1, %c0_4] : memref<5x16xf32, #tpu.memory_space<vmem>>, vector<1x16xf32>
    %11 = vector.broadcast %9 : vector<8x1xf32> to vector<8x16xf32>
    %12 = vector.broadcast %10 : vector<1x16xf32> to vector<8x16xf32>
    %13 = arith.mulf %11, %12 : vector<8x16xf32>
    %14 = arith.addf %8, %13 : vector<8x16xf32>
    %15 = vector.extract_strided_slice %0 {offsets = [0, 2], sizes = [8, 1], strides = [1, 1]} : vector<8x4xf32> to vector<8x1xf32>
    %c2 = arith.constant 2 : index
    %c0_5 = arith.constant 0 : index
    %16 = vector.load %arg2[%c2, %c0_5] : memref<5x16xf32, #tpu.memory_space<vmem>>, vector<1x16xf32>
    %17 = vector.broadcast %15 : vector<8x1xf32> to vector<8x16xf32>
    %18 = vector.broadcast %16 : vector<1x16xf32> to vector<8x16xf32>
    %19 = arith.mulf %17, %18 : vector<8x16xf32>
    %20 = arith.addf %14, %19 : vector<8x16xf32>
    %21 = vector.extract_strided_slice %0 {offsets = [0, 3], sizes = [8, 1], strides = [1, 1]} : vector<8x4xf32> to vector<8x1xf32>
    %c3 = arith.constant 3 : index
    %c0_6 = arith.constant 0 : index
    %22 = vector.load %arg2[%c3, %c0_6] : memref<5x16xf32, #tpu.memory_space<vmem>>, vector<1x16xf32>
    %23 = vector.broadcast %21 : vector<8x1xf32> to vector<8x16xf32>
    %24 = vector.broadcast %22 : vector<1x16xf32> to vector<8x16xf32>
    %25 = arith.mulf %23, %24 : vector<8x16xf32>
    %26 = arith.addf %20, %25 : vector<8x16xf32>
    %cst = arith.constant 0.000000e+00 : f32
    %27 = vector.broadcast %cst : f32 to vector<8x16xf32>
    %28 = arith.maximumf %26, %27 : vector<8x16xf32>
    %c16 = arith.constant 16 : index
    %c0_7 = arith.constant 0 : index
    %29 = vector.load %arg3[%c16, %c0_7] : memref<17x128xf32, #tpu.memory_space<vmem>>, vector<1x128xf32>
    %30 = vector.extract_strided_slice %28 {offsets = [0, 0], sizes = [8, 1], strides = [1, 1]} : vector<8x16xf32> to vector<8x1xf32>
    %c0_8 = arith.constant 0 : index
    %c0_9 = arith.constant 0 : index
    %31 = vector.load %arg3[%c0_8, %c0_9] : memref<17x128xf32, #tpu.memory_space<vmem>>, vector<1x128xf32>
    %32 = vector.broadcast %30 : vector<8x1xf32> to vector<8x128xf32>
    %33 = vector.broadcast %31 : vector<1x128xf32> to vector<8x128xf32>
    %34 = arith.mulf %32, %33 : vector<8x128xf32>
    %35 = vector.broadcast %29 : vector<1x128xf32> to vector<8x128xf32>
    %36 = arith.addf %35, %34 : vector<8x128xf32>
    %37 = vector.extract_strided_slice %28 {offsets = [0, 1], sizes = [8, 1], strides = [1, 1]} : vector<8x16xf32> to vector<8x1xf32>
    %c1_10 = arith.constant 1 : index
    %c0_11 = arith.constant 0 : index
    %38 = vector.load %arg3[%c1_10, %c0_11] : memref<17x128xf32, #tpu.memory_space<vmem>>, vector<1x128xf32>
    %39 = vector.broadcast %37 : vector<8x1xf32> to vector<8x128xf32>
    %40 = vector.broadcast %38 : vector<1x128xf32> to vector<8x128xf32>
    %41 = arith.mulf %39, %40 : vector<8x128xf32>
    %42 = arith.addf %36, %41 : vector<8x128xf32>
    %43 = vector.extract_strided_slice %28 {offsets = [0, 2], sizes = [8, 1], strides = [1, 1]} : vector<8x16xf32> to vector<8x1xf32>
    %c2_12 = arith.constant 2 : index
    %c0_13 = arith.constant 0 : index
    %44 = vector.load %arg3[%c2_12, %c0_13] : memref<17x128xf32, #tpu.memory_space<vmem>>, vector<1x128xf32>
    %45 = vector.broadcast %43 : vector<8x1xf32> to vector<8x128xf32>
    %46 = vector.broadcast %44 : vector<1x128xf32> to vector<8x128xf32>
    %47 = arith.mulf %45, %46 : vector<8x128xf32>
    %48 = arith.addf %42, %47 : vector<8x128xf32>
    %49 = vector.extract_strided_slice %28 {offsets = [0, 3], sizes = [8, 1], strides = [1, 1]} : vector<8x16xf32> to vector<8x1xf32>
    %c3_14 = arith.constant 3 : index
    %c0_15 = arith.constant 0 : index
    %50 = vector.load %arg3[%c3_14, %c0_15] : memref<17x128xf32, #tpu.memory_space<vmem>>, vector<1x128xf32>
    %51 = vector.broadcast %49 : vector<8x1xf32> to vector<8x128xf32>
    %52 = vector.broadcast %50 : vector<1x128xf32> to vector<8x128xf32>
    %53 = arith.mulf %51, %52 : vector<8x128xf32>
    %54 = arith.addf %48, %53 : vector<8x128xf32>
    %55 = vector.extract_strided_slice %28 {offsets = [0, 4], sizes = [8, 1], strides = [1, 1]} : vector<8x16xf32> to vector<8x1xf32>
    %c4_16 = arith.constant 4 : index
    %c0_17 = arith.constant 0 : index
    %56 = vector.load %arg3[%c4_16, %c0_17] : memref<17x128xf32, #tpu.memory_space<vmem>>, vector<1x128xf32>
    %57 = vector.broadcast %55 : vector<8x1xf32> to vector<8x128xf32>
    %58 = vector.broadcast %56 : vector<1x128xf32> to vector<8x128xf32>
    %59 = arith.mulf %57, %58 : vector<8x128xf32>
    %60 = arith.addf %54, %59 : vector<8x128xf32>
    %61 = vector.extract_strided_slice %28 {offsets = [0, 5], sizes = [8, 1], strides = [1, 1]} : vector<8x16xf32> to vector<8x1xf32>
    %c5 = arith.constant 5 : index
    %c0_18 = arith.constant 0 : index
    %62 = vector.load %arg3[%c5, %c0_18] : memref<17x128xf32, #tpu.memory_space<vmem>>, vector<1x128xf32>
    %63 = vector.broadcast %61 : vector<8x1xf32> to vector<8x128xf32>
    %64 = vector.broadcast %62 : vector<1x128xf32> to vector<8x128xf32>
    %65 = arith.mulf %63, %64 : vector<8x128xf32>
    %66 = arith.addf %60, %65 : vector<8x128xf32>
    %67 = vector.extract_strided_slice %28 {offsets = [0, 6], sizes = [8, 1], strides = [1, 1]} : vector<8x16xf32> to vector<8x1xf32>
    %c6 = arith.constant 6 : index
    %c0_19 = arith.constant 0 : index
    %68 = vector.load %arg3[%c6, %c0_19] : memref<17x128xf32, #tpu.memory_space<vmem>>, vector<1x128xf32>
    %69 = vector.broadcast %67 : vector<8x1xf32> to vector<8x128xf32>
    %70 = vector.broadcast %68 : vector<1x128xf32> to vector<8x128xf32>
    %71 = arith.mulf %69, %70 : vector<8x128xf32>
    %72 = arith.addf %66, %71 : vector<8x128xf32>
    %73 = vector.extract_strided_slice %28 {offsets = [0, 7], sizes = [8, 1], strides = [1, 1]} : vector<8x16xf32> to vector<8x1xf32>
    %c7 = arith.constant 7 : index
    %c0_20 = arith.constant 0 : index
    %74 = vector.load %arg3[%c7, %c0_20] : memref<17x128xf32, #tpu.memory_space<vmem>>, vector<1x128xf32>
    %75 = vector.broadcast %73 : vector<8x1xf32> to vector<8x128xf32>
    %76 = vector.broadcast %74 : vector<1x128xf32> to vector<8x128xf32>
    %77 = arith.mulf %75, %76 : vector<8x128xf32>
    %78 = arith.addf %72, %77 : vector<8x128xf32>
    %79 = vector.extract_strided_slice %28 {offsets = [0, 8], sizes = [8, 1], strides = [1, 1]} : vector<8x16xf32> to vector<8x1xf32>
    %c8 = arith.constant 8 : index
    %c0_21 = arith.constant 0 : index
    %80 = vector.load %arg3[%c8, %c0_21] : memref<17x128xf32, #tpu.memory_space<vmem>>, vector<1x128xf32>
    %81 = vector.broadcast %79 : vector<8x1xf32> to vector<8x128xf32>
    %82 = vector.broadcast %80 : vector<1x128xf32> to vector<8x128xf32>
    %83 = arith.mulf %81, %82 : vector<8x128xf32>
    %84 = arith.addf %78, %83 : vector<8x128xf32>
    %85 = vector.extract_strided_slice %28 {offsets = [0, 9], sizes = [8, 1], strides = [1, 1]} : vector<8x16xf32> to vector<8x1xf32>
    %c9 = arith.constant 9 : index
    %c0_22 = arith.constant 0 : index
    %86 = vector.load %arg3[%c9, %c0_22] : memref<17x128xf32, #tpu.memory_space<vmem>>, vector<1x128xf32>
    %87 = vector.broadcast %85 : vector<8x1xf32> to vector<8x128xf32>
    %88 = vector.broadcast %86 : vector<1x128xf32> to vector<8x128xf32>
    %89 = arith.mulf %87, %88 : vector<8x128xf32>
    %90 = arith.addf %84, %89 : vector<8x128xf32>
    %91 = vector.extract_strided_slice %28 {offsets = [0, 10], sizes = [8, 1], strides = [1, 1]} : vector<8x16xf32> to vector<8x1xf32>
    %c10 = arith.constant 10 : index
    %c0_23 = arith.constant 0 : index
    %92 = vector.load %arg3[%c10, %c0_23] : memref<17x128xf32, #tpu.memory_space<vmem>>, vector<1x128xf32>
    %93 = vector.broadcast %91 : vector<8x1xf32> to vector<8x128xf32>
    %94 = vector.broadcast %92 : vector<1x128xf32> to vector<8x128xf32>
    %95 = arith.mulf %93, %94 : vector<8x128xf32>
    %96 = arith.addf %90, %95 : vector<8x128xf32>
    %97 = vector.extract_strided_slice %28 {offsets = [0, 11], sizes = [8, 1], strides = [1, 1]} : vector<8x16xf32> to vector<8x1xf32>
    %c11 = arith.constant 11 : index
    %c0_24 = arith.constant 0 : index
    %98 = vector.load %arg3[%c11, %c0_24] : memref<17x128xf32, #tpu.memory_space<vmem>>, vector<1x128xf32>
    %99 = vector.broadcast %97 : vector<8x1xf32> to vector<8x128xf32>
    %100 = vector.broadcast %98 : vector<1x128xf32> to vector<8x128xf32>
    %101 = arith.mulf %99, %100 : vector<8x128xf32>
    %102 = arith.addf %96, %101 : vector<8x128xf32>
    %103 = vector.extract_strided_slice %28 {offsets = [0, 12], sizes = [8, 1], strides = [1, 1]} : vector<8x16xf32> to vector<8x1xf32>
    %c12 = arith.constant 12 : index
    %c0_25 = arith.constant 0 : index
    %104 = vector.load %arg3[%c12, %c0_25] : memref<17x128xf32, #tpu.memory_space<vmem>>, vector<1x128xf32>
    %105 = vector.broadcast %103 : vector<8x1xf32> to vector<8x128xf32>
    %106 = vector.broadcast %104 : vector<1x128xf32> to vector<8x128xf32>
    %107 = arith.mulf %105, %106 : vector<8x128xf32>
    %108 = arith.addf %102, %107 : vector<8x128xf32>
    %109 = vector.extract_strided_slice %28 {offsets = [0, 13], sizes = [8, 1], strides = [1, 1]} : vector<8x16xf32> to vector<8x1xf32>
    %c13 = arith.constant 13 : index
    %c0_26 = arith.constant 0 : index
    %110 = vector.load %arg3[%c13, %c0_26] : memref<17x128xf32, #tpu.memory_space<vmem>>, vector<1x128xf32>
    %111 = vector.broadcast %109 : vector<8x1xf32> to vector<8x128xf32>
    %112 = vector.broadcast %110 : vector<1x128xf32> to vector<8x128xf32>
    %113 = arith.mulf %111, %112 : vector<8x128xf32>
    %114 = arith.addf %108, %113 : vector<8x128xf32>
    %115 = vector.extract_strided_slice %28 {offsets = [0, 14], sizes = [8, 1], strides = [1, 1]} : vector<8x16xf32> to vector<8x1xf32>
    %c14 = arith.constant 14 : index
    %c0_27 = arith.constant 0 : index
    %116 = vector.load %arg3[%c14, %c0_27] : memref<17x128xf32, #tpu.memory_space<vmem>>, vector<1x128xf32>
    %117 = vector.broadcast %115 : vector<8x1xf32> to vector<8x128xf32>
    %118 = vector.broadcast %116 : vector<1x128xf32> to vector<8x128xf32>
    %119 = arith.mulf %117, %118 : vector<8x128xf32>
    %120 = arith.addf %114, %119 : vector<8x128xf32>
    %121 = vector.extract_strided_slice %28 {offsets = [0, 15], sizes = [8, 1], strides = [1, 1]} : vector<8x16xf32> to vector<8x1xf32>
    %c15 = arith.constant 15 : index
    %c0_28 = arith.constant 0 : index
    %122 = vector.load %arg3[%c15, %c0_28] : memref<17x128xf32, #tpu.memory_space<vmem>>, vector<1x128xf32>
    %123 = vector.broadcast %121 : vector<8x1xf32> to vector<8x128xf32>
    %124 = vector.broadcast %122 : vector<1x128xf32> to vector<8x128xf32>
    %125 = arith.mulf %123, %124 : vector<8x128xf32>
    %126 = arith.addf %120, %125 : vector<8x128xf32>
    %127 = vector.extract_strided_slice %126 {offsets = [0, 0], sizes = [8, 1], strides = [1, 1]} : vector<8x128xf32> to vector<8x1xf32>
    %128 = vector.extract_strided_slice %126 {offsets = [0, 1], sizes = [8, 1], strides = [1, 1]} : vector<8x128xf32> to vector<8x1xf32>
    %129 = arith.maximumf %127, %128 : vector<8x1xf32>
    %130 = arith.subf %127, %129 : vector<8x1xf32>
    %131 = math.exp %130 : vector<8x1xf32>
    %132 = arith.subf %128, %129 : vector<8x1xf32>
    %133 = math.exp %132 : vector<8x1xf32>
    %134 = arith.addf %131, %133 : vector<8x1xf32>
    %135 = tpu.reciprocal %134 {approx = true} : vector<8x1xf32> -> vector<8x1xf32>
    %136 = tpu.iota {dimensions = array<i32: 1>} : vector<8x128xi32>
    %cst_29 = arith.constant 0.000000e+00 : f32
    %137 = vector.broadcast %cst_29 : f32 to vector<8x128xf32>
    %c0_i32 = arith.constant 0 : i32
    %138 = vector.broadcast %c0_i32 : i32 to vector<8x128xi32>
    %139 = arith.cmpi eq, %136, %138 : vector<8x128xi32>
    %140 = arith.mulf %131, %135 : vector<8x1xf32>
    %141 = vector.shape_cast %140 : vector<8x1xf32> to vector<8x1xf32>
    %142 = vector.broadcast %141 : vector<8x1xf32> to vector<8x128xf32>
    %143 = arith.select %139, %142, %137 : vector<8x128xi1>, vector<8x128xf32>
    %c1_i32 = arith.constant 1 : i32
    %144 = vector.broadcast %c1_i32 : i32 to vector<8x128xi32>
    %145 = arith.cmpi eq, %136, %144 : vector<8x128xi32>
    %146 = arith.mulf %133, %135 : vector<8x1xf32>
    %147 = vector.shape_cast %146 : vector<8x1xf32> to vector<8x1xf32>
    %148 = vector.broadcast %147 : vector<8x1xf32> to vector<8x128xf32>
    %149 = arith.select %145, %148, %143 : vector<8x128xi1>, vector<8x128xf32>
    %c0_30 = arith.constant 0 : index
    %c0_31 = arith.constant 0 : index
    %150 = vector.load %arg4[%c0_30, %c0_31] : memref<8x128xf32, #tpu.memory_space<vmem>>, vector<8x128xf32>
    tpu.vector_store %arg4[%c0_30, %c0_31], %149 {strides = array<i32>} : memref<8x128xf32, #tpu.memory_space<vmem>>, vector<8x128xf32>,
    return
  }
  func.func @transform_0(%arg0: i32) -> (i32, i32) {
    %c0_i32 = arith.constant 0 : i32
    %c0_i32_0 = arith.constant 0 : i32
    return %arg0, %c0_i32 : i32, i32
  }
  func.func @transform_1(%arg0: i32) -> (i32, i32) {
    %c0_i32 = arith.constant 0 : i32
    %c0_i32_0 = arith.constant 0 : i32
    %c0_i32_1 = arith.constant 0 : i32
    return %c0_i32, %c0_i32_0 : i32, i32
  }
  func.func @transform_2(%arg0: i32) -> (i32, i32) {
    %c0_i32 = arith.constant 0 : i32
    %c0_i32_0 = arith.constant 0 : i32
    %c0_i32_1 = arith.constant 0 : i32
    return %c0_i32, %c0_i32_0 : i32, i32
  }
  func.func @transform_3(%arg0: i32) -> (i32, i32) {
    %c0_i32 = arith.constant 0 : i32
    %c0_i32_0 = arith.constant 0 : i32
    return %arg0, %c0_i32 : i32, i32
  }
}

</mosaic_0001>

<llo_original>
// kernel: tpu_custom_call.1
$region0: #{tpu_custom_call.1}
  #allocation0 [shape = 'u32[]', space=smem, size = 0x4, offset = 0x4, fixed_abs, tag = 'smem constant byte address 0x4 - core index']
  #allocation1 [shape = 'u32[144,128]{1,0:T(1,128)}', space=vmem, size = 0x12000, scoped, tag = 'internal scratch']
  %s0 = inlined_call_operand.vmem [shape: f32[8,4], index: 0, kind: input, shape index: {}]
  %s1 = inlined_call_operand.vmem [shape: f32[5,16], index: 1, kind: input, shape index: {}]
  %s2 = inlined_call_operand.hbm [shape: f32[17,128], index: 2, kind: input, shape index: {}]
  %s3 = inlined_call_operand.hbm [shape: f32[8,128], index: 3, kind: output, shape index: {}]
  %s4 = sld [smem:[#allocation0]]
  $region26: #{tpu_custom_call.1} parent=0
    _
  %s6 = ssub.s32 1, %s4
  %s7 = scalar_select 0, %s6, %s4
  $region1: #{tpu_custom_call.1} parent=0
    #allocation2 [shape = 'u8[12288]{0}', space=vmem, size = 0x3000, scoped, tag = 'input window, operand 2, single buffered']
    #allocation3 [shape = 's32[1]{0}', space=sflag, size = 0x4, scoped, tag = 'scoped memory for tpu_custom_call.1']
    #allocation4 [shape = 's32[1]{0}', space=sflag, size = 0x4, scoped, tag = 'scoped memory for tpu_custom_call.1']
    #allocation5 [shape = 'u8[4096]{0}', space=vmem, size = 0x1000, scoped, tag = 'output window, operand 0, single buffered']
    %8 = vsyncpa [#allocation3], 0
    %9 = vsyncpa [#allocation4], 0
    // Predicated region
    $region2: #{tpu_custom_call.1} parent=1 // pred_check
      _
    $region3: #{tpu_custom_call.1} parent=1 // pred_check_branch
      %11 = sbr.rel (0) target = $region5
    $region4: #{tpu_custom_call.1} parent=1 // pred_region
      _
    $region5: #{tpu_custom_call.1} parent=1 // pred_fallthru
      _
    // Predicated region
    $region6: #{tpu_custom_call.1} parent=1 // pred_check
      _
    $region7: #{tpu_custom_call.1} parent=1 // pred_check_branch
      %13 = sbr.rel (0) target = $region9
    $region8: #{tpu_custom_call.1} parent=1 // pred_region
      _
    $region9: #{tpu_custom_call.1} parent=1 // pred_fallthru
      _
    // Predicated region
    $region10: #{tpu_custom_call.1} parent=1 // pred_check
      _
    $region11: #{tpu_custom_call.1} parent=1 // pred_check_branch
      %15 = sbr.rel (0) target = $region13
    $region12: #{tpu_custom_call.1} parent=1 // pred_region
      %s17 = ssub.s32 384, 384
      %18 = vsyncadd [#allocation3], %s17
      %s19 = sshll.u32 [#allocation2], 4
      %s20 = int_to_ptr.vmem [resolvable:$true] %s19
      %25 = dma.hbm_to_vmem [thread:$0]  %s2, 384, %s20, [#allocation3], 128, 128, 8
    $region13: #{tpu_custom_call.1} parent=1 // pred_fallthru
      _
    // Predicated region
    $region14: #{tpu_custom_call.1} parent=1 // pred_check
      _
    $region15: #{tpu_custom_call.1} parent=1 // pred_check_branch
      %27 = sbr.rel (0) target = $region17
    $region16: #{tpu_custom_call.1} parent=1 // pred_region
      %28 = dma.done [#allocation3], 384
    $region17: #{tpu_custom_call.1} parent=1 // pred_fallthru
      _
    %v29 = vld [vmem:[%s0] sm:$0xff]
    %v30 = vld [vmem:[%s1 + $0x4] sm:$0x1]
    %v31 = vld [vmem:[%s1] sm:$0x1]
    %33 = vset.pattern.permute.xlu0 0
    %34 = vperm.xlu0 %33, %v29
    %v35 = vpop.permute.xlu0 %34
    %v37 = vlaneseq
    %v38 = vshrl.u32 %v37, 7
    %v39 = vsub.s32 0, %v38
    %v40 = vrot.slane %v31, %v39
    %v41 = vmul.f32 %v35, %v40
    %v42 = vlaneseq
    %v43 = vshrl.u32 %v42, 7
    %v44 = vsub.s32 0, %v43
    %v45 = vrot.slane %v30, %v44
    %v46 = vadd.f32 %v45, %v41
    %v47 = vld [vmem:[%s1 + $0x1] sm:$0x1]
    %48 = vset.pattern.permute.xlu0 1
    %49 = vperm.xlu0 %48, %v29
    %v50 = vpop.permute.xlu0 %49
    %v52 = vlaneseq
    %v53 = vshrl.u32 %v52, 7
    %v54 = vsub.s32 0, %v53
    %v55 = vrot.slane %v47, %v54
    %v56 = vmul.f32 %v50, %v55
    %v57 = vadd.f32 %v46, %v56
    %v58 = vld [vmem:[%s1 + $0x2] sm:$0x1]
    %59 = vset.pattern.permute.xlu0 2
    %60 = vperm.xlu0 %59, %v29
    %v61 = vpop.permute.xlu0 %60
    %v63 = vlaneseq
    %v64 = vshrl.u32 %v63, 7
    %v65 = vsub.s32 0, %v64
    %v66 = vrot.slane %v58, %v65
    %v67 = vmul.f32 %v61, %v66
    %v68 = vadd.f32 %v57, %v67
    %v69 = vld [vmem:[%s1 + $0x3] sm:$0x1]
    %70 = vset.pattern.permute.xlu0 3
    %71 = vperm.xlu0 %70, %v29
    %v72 = vpop.permute.xlu0 %71
    %v74 = vlaneseq
    %v75 = vshrl.u32 %v74, 7
    %v76 = vsub.s32 0, %v75
    %v77 = vrot.slane %v69, %v76
    %v78 = vmul.f32 %v72, %v77
    %v79 = vadd.f32 %v68, %v78
    %v80 = vmax.f32 %v79, 0.0
    %v81 = vld [vmem:[#allocation2 + $0x10] sm:$0x1]
    %v82 = vld [vmem:[#allocation2] sm:$0x1]
    %84 = vset.pattern.permute.xlu0 0
    %85 = vperm.xlu0 %84, %v80
    %v86 = vpop.permute.xlu0 %85
    %v88 = vlaneseq
    %v89 = vshrl.u32 %v88, 7
    %v90 = vsub.s32 0, %v89
    %v91 = vrot.slane %v82, %v90
    %v92 = vmul.f32 %v86, %v91
    %v93 = vlaneseq
    %v94 = vshrl.u32 %v93, 7
    %v95 = vsub.s32 0, %v94
    %v96 = vrot.slane %v81, %v95
    %v97 = vadd.f32 %v96, %v92
    %v98 = vld [vmem:[#allocation2 + $0x1] sm:$0x1]
    %99 = vset.pattern.permute.xlu0 1
    %100 = vperm.xlu0 %99, %v80
    %v101 = vpop.permute.xlu0 %100
    %v103 = vlaneseq
    %v104 = vshrl.u32 %v103, 7
    %v105 = vsub.s32 0, %v104
    %v106 = vrot.slane %v98, %v105
    %v107 = vmul.f32 %v101, %v106
    %v108 = vadd.f32 %v97, %v107
    %v109 = vld [vmem:[#allocation2 + $0x2] sm:$0x1]
    %110 = vset.pattern.permute.xlu0 2
    %111 = vperm.xlu0 %110, %v80
    %v112 = vpop.permute.xlu0 %111
    %v114 = vlaneseq
    %v115 = vshrl.u32 %v114, 7
    %v116 = vsub.s32 0, %v115
    %v117 = vrot.slane %v109, %v116
    %v118 = vmul.f32 %v112, %v117
    %v119 = vadd.f32 %v108, %v118
    %v120 = vld [vmem:[#allocation2 + $0x3] sm:$0x1]
    %121 = vset.pattern.permute.xlu0 3
    %122 = vperm.xlu0 %121, %v80
    %v123 = vpop.permute.xlu0 %122
    %v125 = vlaneseq
    %v126 = vshrl.u32 %v125, 7
    %v127 = vsub.s32 0, %v126
    %v128 = vrot.slane %v120, %v127
    %v129 = vmul.f32 %v123, %v128
    %v130 = vadd.f32 %v119, %v129
    %v131 = vld [vmem:[#allocation2 + $0x4] sm:$0x1]
    %132 = vset.pattern.permute.xlu0 4
    %133 = vperm.xlu0 %132, %v80
    %v134 = vpop.permute.xlu0 %133
    %v136 = vlaneseq
    %v137 = vshrl.u32 %v136, 7
    %v138 = vsub.s32 0, %v137
    %v139 = vrot.slane %v131, %v138
    %v140 = vmul.f32 %v134, %v139
    %v141 = vadd.f32 %v130, %v140
    %v142 = vld [vmem:[#allocation2 + $0x5] sm:$0x1]
    %143 = vset.pattern.permute.xlu0 5
    %144 = vperm.xlu0 %143, %v80
    %v145 = vpop.permute.xlu0 %144
    %v147 = vlaneseq
    %v148 = vshrl.u32 %v147, 7
    %v149 = vsub.s32 0, %v148
    %v150 = vrot.slane %v142, %v149
    %v151 = vmul.f32 %v145, %v150
    %v152 = vadd.f32 %v141, %v151
    %v153 = vld [vmem:[#allocation2 + $0x6] sm:$0x1]
    %154 = vset.pattern.permute.xlu0 6
    %155 = vperm.xlu0 %154, %v80
    %v156 = vpop.permute.xlu0 %155
    %v158 = vlaneseq
    %v159 = vshrl.u32 %v158, 7
    %v160 = vsub.s32 0, %v159
    %v161 = vrot.slane %v153, %v160
    %v162 = vmul.f32 %v156, %v161
    %v163 = vadd.f32 %v152, %v162
    %v164 = vld [vmem:[#allocation2 + $0x7] sm:$0x1]
    %165 = vset.pattern.permute.xlu0 7
    %166 = vperm.xlu0 %165, %v80
    %v167 = vpop.permute.xlu0 %166
    %v169 = vlaneseq
    %v170 = vshrl.u32 %v169, 7
    %v171 = vsub.s32 0, %v170
    %v172 = vrot.slane %v164, %v171
    %v173 = vmul.f32 %v167, %v172
    %v174 = vadd.f32 %v163, %v173
    %v175 = vld [vmem:[#allocation2 + $0x8] sm:$0x1]
    %176 = vset.pattern.permute.xlu0 8
    %177 = vperm.xlu0 %176, %v80
    %v178 = vpop.permute.xlu0 %177
    %v180 = vlaneseq
    %v181 = vshrl.u32 %v180, 7
    %v182 = vsub.s32 0, %v181
    %v183 = vrot.slane %v175, %v182
    %v184 = vmul.f32 %v178, %v183
    %v185 = vadd.f32 %v174, %v184
    %v186 = vld [vmem:[#allocation2 + $0x9] sm:$0x1]
    %187 = vset.pattern.permute.xlu0 9
    %188 = vperm.xlu0 %187, %v80
    %v189 = vpop.permute.xlu0 %188
    %v191 = vlaneseq
    %v192 = vshrl.u32 %v191, 7
    %v193 = vsub.s32 0, %v192
    %v194 = vrot.slane %v186, %v193
    %v195 = vmul.f32 %v189, %v194
    %v196 = vadd.f32 %v185, %v195
    %v197 = vld [vmem:[#allocation2 + $0xa] sm:$0x1]
    %198 = vset.pattern.permute.xlu0 10
    %199 = vperm.xlu0 %198, %v80
    %v200 = vpop.permute.xlu0 %199
    %v202 = vlaneseq
    %v203 = vshrl.u32 %v202, 7
    %v204 = vsub.s32 0, %v203
    %v205 = vrot.slane %v197, %v204
    %v206 = vmul.f32 %v200, %v205
    %v207 = vadd.f32 %v196, %v206
    %v208 = vld [vmem:[#allocation2 + $0xb] sm:$0x1]
    %209 = vset.pattern.permute.xlu0 11
    %210 = vperm.xlu0 %209, %v80
    %v211 = vpop.permute.xlu0 %210
    %v213 = vlaneseq
    %v214 = vshrl.u32 %v213, 7
    %v215 = vsub.s32 0, %v214
    %v216 = vrot.slane %v208, %v215
    %v217 = vmul.f32 %v211, %v216
    %v218 = vadd.f32 %v207, %v217
    %v219 = vld [vmem:[#allocation2 + $0xc] sm:$0x1]
    %220 = vset.pattern.permute.xlu0 12
    %221 = vperm.xlu0 %220, %v80
    %v222 = vpop.permute.xlu0 %221
    %v224 = vlaneseq
    %v225 = vshrl.u32 %v224, 7
    %v226 = vsub.s32 0, %v225
    %v227 = vrot.slane %v219, %v226
    %v228 = vmul.f32 %v222, %v227
    %v229 = vadd.f32 %v218, %v228
    %v230 = vld [vmem:[#allocation2 + $0xd] sm:$0x1]
    %231 = vset.pattern.permute.xlu0 13
    %232 = vperm.xlu0 %231, %v80
    %v233 = vpop.permute.xlu0 %232
    %v235 = vlaneseq
    %v236 = vshrl.u32 %v235, 7
    %v237 = vsub.s32 0, %v236
    %v238 = vrot.slane %v230, %v237
    %v239 = vmul.f32 %v233, %v238
    %v240 = vadd.f32 %v229, %v239
    %v241 = vld [vmem:[#allocation2 + $0xe] sm:$0x1]
    %242 = vset.pattern.permute.xlu0 14
    %243 = vperm.xlu0 %242, %v80
    %v244 = vpop.permute.xlu0 %243
    %v246 = vlaneseq
    %v247 = vshrl.u32 %v246, 7
    %v248 = vsub.s32 0, %v247
    %v249 = vrot.slane %v241, %v248
    %v250 = vmul.f32 %v244, %v249
    %v251 = vadd.f32 %v240, %v250
    %v252 = vld [vmem:[#allocation2 + $0xf] sm:$0x1]
    %253 = vset.pattern.permute.xlu0 15
    %254 = vperm.xlu0 %253, %v80
    %v255 = vpop.permute.xlu0 %254
    %v257 = vlaneseq
    %v258 = vshrl.u32 %v257, 7
    %v259 = vsub.s32 0, %v258
    %v260 = vrot.slane %v252, %v259
    %v261 = vmul.f32 %v255, %v260
    %v262 = vadd.f32 %v251, %v261
    %264 = vrot.lane.b32.xlu0 %v262, 127
    %v265 = vpop.permute.xlu0 %264
    %v267 = vmax.f32 %v262, %v265
    %v268 = vsub.f32 %v262, %v267
    %v269 = vmul.f32 %v268, 1.442695
    %v270 = vpow.pop %v269
    %272 = vrot.lane.b32.xlu0 %v267, 1
    %v273 = vpop.permute.xlu0 %272
    %v275 = vsub.f32 %v262, %v273
    %v276 = vmul.f32 %v275, 1.442695
    %v277 = vpow.pop %v276
    %279 = vrot.lane.b32.xlu0 %v277, 127
    %v280 = vpop.permute.xlu0 %279
    %v282 = vadd.f32 %v270, %v280
    %v283 = vrcp.pop %v282
    %v284 = vlaneseq
    %v285 = vand.u32 %v284, 127
    %vm286 = vcmp.eq.s32.totalorder %v285, 0
    %v287 = vmul.f32 %v270, %v283
    %289 = vset.pattern.permute.xlu0 0
    %290 = vperm.xlu0 %289, %v287
    %v291 = vpop.permute.xlu0 %290
    %v293 = vsel %vm286, %v291, 0.0
    %vm294 = vcmp.eq.s32.totalorder %v285, 1
    %296 = vrot.lane.b32.xlu0 %v283, 1
    %v297 = vpop.permute.xlu0 %296
    %v299 = vmul.f32 %v277, %v297
    %301 = vset.pattern.permute.xlu0 1
    %302 = vperm.xlu0 %301, %v299
    %v303 = vpop.permute.xlu0 %302
    %v305 = vsel %vm294, %v303, %v293
    %306 = vst [vmem:[#allocation5] sm:$0xff] %v305
    // Predicated region
    $region18: #{tpu_custom_call.1} parent=1 // pred_check
      _
    $region19: #{tpu_custom_call.1} parent=1 // pred_check_branch
      %308 = sbr.rel (0) target = $region21
    $region20: #{tpu_custom_call.1} parent=1 // pred_region
      %s310 = ssub.s32 128, 128
      %311 = vsyncadd [#allocation4], %s310
      %s313 = sshll.u32 [#allocation5], 4
      %s314 = int_to_ptr.vmem [resolvable:$true] %s313
      %316 = dma.vmem_to_hbm [thread:$0]  %s314, 128, %s3, [#allocation4]
    $region21: #{tpu_custom_call.1} parent=1 // pred_fallthru
      _
    // Predicated region
    $region22: #{tpu_custom_call.1} parent=1 // pred_check
      _
    $region23: #{tpu_custom_call.1} parent=1 // pred_check_branch
      %318 = sbr.rel (0) target = $region25
    $region24: #{tpu_custom_call.1} parent=1 // pred_region
      %319 = dma.done [#allocation4], 128
    $region25: #{tpu_custom_call.1} parent=1 // pred_fallthru
      _
    %320 = vsyncpa [#allocation3], 1
    %321 = vsyncpa [#allocation4], 1

</llo_original>
